<compile_context>
chip_gen: v5e
topology: v5e:2x2
jax: 0.10.0
libtpu: 0.0.40
codegen_flags: <defaults>
</compile_context>

<pallas_src>
import functools

import jax
import jax.numpy as jnp
from jax import lax
from jax.experimental import pallas as pl
from jax.experimental.pallas import tpu as pltpu


def _mcc_stats_kernel(pred_ref, tgt_ref, out_ref, *, ignore_index, num_pix, ragged):
    """Per-(image, split, spatial-tile) kernel.

    pred_ref: (1, C, T)     logits, native dtype (bf16 friendly)
    tgt_ref : (1, 1, T)     int32 labels (padded with ignore_index)
    out_ref : (1, 4, C, 1)  f32 accumulator, resident across the p axis.
                            rows = [TP, S_p, S_o, N_valid] per class.
    """
    p_step = pl.program_id(2)

    @pl.when(p_step == 0)
    def _():
        out_ref[...] = jnp.zeros_like(out_ref)

    x = pred_ref[0].astype(jnp.float32)            # (C, T), cast in-kernel
    tgt = tgt_ref[0]                               # (1, T) int32
    C, T = x.shape

    if ragged:
        # The last pred block is partially out of bounds (and fully-padded
        # grid steps re-read a clamped block): zero those lanes so no
        # non-finite garbage can poison exp/reciprocal.  Target-based
        # validity (padded with ignore_index) already zeroes their stats.
        blk = pl.program_id(1) * pl.num_programs(2) + p_step
        lane = lax.broadcasted_iota(jnp.int32, (1, T), 1)
        lane_ok = (lane + blk * T) < num_pix       # (1, T) bool
        x = jnp.where(lane_ok, x, 0.0)

    # --- softmax over the class (sublane) axis -------------------------------
    m = jnp.max(x, axis=0, keepdims=True)          # (1, T)
    e = jnp.exp(x - m)                             # (C, T)  EUP
    z = jnp.sum(e, axis=0, keepdims=True)          # (1, T)

    # One per-pixel EUP reciprocal + one Newton step (f32-accurate); valid
    # mask folded in once per pixel (not once per class).
    r = pl.reciprocal(z, approx=True)              # (1, T)
    r = r * (2.0 - z * r)
    valid_b = tgt != ignore_index                  # (1, T) bool
    valid_f = valid_b.astype(jnp.float32)          # (1, T)
    r = r * valid_f
    pv = e * r                                     # (C, T) = softmax * valid

    # one-hot(valid-masked, clamped target): all the masking work lives on the
    # (1, T) row; the (C, T) part is a single broadcasted compare.
    tsel = jnp.where(valid_b, jnp.clip(tgt, 0, C - 1), C)       # (1, T)
    cls = lax.broadcasted_iota(jnp.int32, (C, 1), 0)            # (C, 1)
    ohv = (cls == tsel).astype(jnp.float32)                     # (C, T)

    # Lane reductions on the MXU (frees the VALU slot); FP/FN/TN derived in glue.
    ones = jnp.ones((T, 1), jnp.float32)
    tp_c = jnp.dot(pv * ohv, ones, preferred_element_type=jnp.float32)  # (C, 1)
    sp_c = jnp.dot(pv, ones, preferred_element_type=jnp.float32)        # (C, 1)
    so_c = jnp.dot(ohv, ones, preferred_element_type=jnp.float32)       # (C, 1)
    nv = jnp.sum(valid_f, axis=1, keepdims=True)                        # (1, 1)

    out_ref[0, 0] += tp_c                          # TP
    out_ref[0, 1] += sp_c                          # S_p = sum probs * valid
    out_ref[0, 2] += so_c                          # S_o = sum onehot * valid
    out_ref[0, 3] += nv                            # valid count (broadcast to C)


def focal_phi_loss(
    pred,
    target,
    *,
    gamma=1.5,
    smooth=1e-8,
    loss_weight=1.0,
    ignore_index=255,
    class_weight=None,
    tile_p=32768,
    vmem_budget_bytes=36 << 20,
):
    """Forward pass of FocalPhiLoss (reduction='mean', avg_factor=None)."""
    N, C, H, W = pred.shape
    P = H * W

    pred_r = pred.reshape(N, C, P)                       # keep native dtype
    tgt_r = target.reshape(N, 1, P).astype(jnp.int32)

    # Lane tile: multiple of 128, as large as the VMEM budget allows
    # (double-buffered inputs + ~5 f32 (C,tile) intermediates), capped at
    # tile_p.  The explicit vmem_limit below is safe on v5e/v6e/v7x.
    itemsize = jnp.dtype(pred_r.dtype).itemsize
    per_lane = 2 * (C * itemsize + 4) + 5 * C * 4 + 8
    tile = min(tile_p, vmem_budget_bytes // per_lane, max(P, 128))
    tile = max(128, (tile // 128) * 128)

    p_tiles = -(-P // tile)                              # ceil
    n_split = 2 if p_tiles >= 2 else 1                   # both v7x TensorCores
    npps = -(-p_tiles // n_split)                        # p-tiles per split
    p_pad = npps * n_split * tile
    ragged = (P % tile) != 0
    last_blk = p_tiles - 1

    if p_pad != P:
        # Only the small int32 target is padded (ignore_index => valid mask 0);
        # pred is left untouched and ragged lanes are masked in-kernel.
        tgt_r = jnp.pad(tgt_r, ((0, 0), (0, 0), (0, p_pad - P)),
                        constant_values=ignore_index)

    kernel = functools.partial(_mcc_stats_kernel, ignore_index=ignore_index,
                               num_pix=P, ragged=ragged)

    stats = pl.pallas_call(
        kernel,
        out_shape=jax.ShapeDtypeStruct((N * n_split, 4, C, 1), jnp.float32),
        grid=(N, n_split, npps),
        in_specs=[
            # Clamp the pred block index so grid steps that land entirely in
            # the padded tail re-read the last real block (never a fully-OOB DMA).
            pl.BlockSpec((1, C, tile),
                         lambda n, s, p: (n, 0, jnp.minimum(s * npps + p, last_blk))),
            pl.BlockSpec((1, 1, tile),
                         lambda n, s, p: (n, 0, s * npps + p)),
        ],
        out_specs=pl.BlockSpec((1, 4, C, 1),
                               lambda n, s, p: (n * n_split + s, 0, 0, 0)),
        compiler_params=pltpu.CompilerParams(
            dimension_semantics=("parallel", "parallel", "arbitrary"),
            vmem_limit_bytes=48 << 20),
    )(pred_r, tgt_r)

    # Reduce the per-core-split partial stats in the glue.
    stats = stats[..., 0].reshape(N, n_split, 4, C).sum(axis=1)   # (N, 4, C)

    TP = stats[:, 0]                               # (N, C)
    SP = stats[:, 1]                               # sum probs * valid
    SO = stats[:, 2]                               # sum onehot * valid
    NV = stats[:, 3]                               # valid count (same per class)

    FP = SP - TP
    FN = SO - TP
    TN = NV - SP - SO + TP

    numerator = TP * TN - FP * FN + smooth
    denominator = jnp.sqrt((TP + FP) * (TP + FN) * (TN + FP) * (TN + FN)) + smooth
    mcc = numerator / denominator
    binary_loss = jnp.maximum(1.0 - mcc, 0.0)      # clamp: avoid NaN in pow(gamma)

    per_class = jnp.mean(binary_loss, axis=0)      # @weighted_loss: mean over batch
    focal = per_class ** gamma
    if class_weight is not None:
        focal = focal * jnp.asarray(class_weight, dtype=focal.dtype)
    # `if i != ignore_index` in the per-class loop is always true for C < 255.
    total = jnp.sum(focal) / C
    return loss_weight * total


def _reference_focal_phi_loss(pred, target, *, gamma=1.5, smooth=1e-8,
                              loss_weight=1.0, ignore_index=255):
    """Pure-JAX reference mirroring the PyTorch semantics (sanity check)."""
    N, C, H, W = pred.shape
    probs = jax.nn.softmax(pred.astype(jnp.float32), axis=1)      # (N, C, H, W)
    onehot = jax.nn.one_hot(jnp.clip(target, 0, C - 1), C)        # (N, H, W, C)
    onehot = jnp.moveaxis(onehot, -1, 1)                          # (N, C, H, W)
    valid = (target != ignore_index).astype(jnp.float32)[:, None] # (N, 1, H, W)

    TP = jnp.sum(probs * onehot * valid, axis=(2, 3))
    TN = jnp.sum((1 - probs) * (1 - onehot) * valid, axis=(2, 3))
    FP = jnp.sum(probs * (1 - onehot) * valid, axis=(2, 3))
    FN = jnp.sum((1 - probs) * onehot * valid, axis=(2, 3))

    mcc = (TP * TN - FP * FN + smooth) / (
        jnp.sqrt((TP + FP) * (TP + FN) * (TN + FP) * (TN + FN)) + smooth)
    per_class = jnp.mean(1.0 - mcc, axis=0)
    return loss_weight * jnp.sum(per_class ** gamma) / C


if __name__ == "__main__":
    key = jax.random.PRNGKey(0)
    kp, kt, km = jax.random.split(key, 3)

    N, C, H, W = 2, 4, 16, 16
    pred = jax.random.normal(kp, (N, C, H, W), dtype=jnp.float32)
    target = jax.random.randint(kt, (N, H, W), 0, C, dtype=jnp.int32)
    ignore_pix = jax.random.bernoulli(km, 0.1, (N, H, W))
    target = jnp.where(ignore_pix, jnp.int32(255), target)

    ref = _reference_focal_phi_loss(pred, target)

    # 1) Default tiling (single spatial tile at this size).
    loss = jax.block_until_ready(focal_phi_loss(pred, target))
    assert jnp.allclose(loss, ref, rtol=1e-4, atol=1e-5), (loss, ref)

    # 2) Force multiple tiles + the 2-way core-split axis (divisible case).
    loss2 = jax.block_until_ready(focal_phi_loss(pred, target, tile_p=128))
    assert jnp.allclose(loss2, ref, rtol=1e-4, atol=1e-5), (loss2, ref)

    # 3) Ragged spatial extent (P % tile != 0) + split + fully-padded step.
    H3 = 17
    kp3, kt3, km3 = jax.random.split(jax.random.PRNGKey(1), 3)
    pred3 = jax.random.normal(kp3, (N, C, H3, W), dtype=jnp.float32)
    target3 = jax.random.randint(kt3, (N, H3, W), 0, C, dtype=jnp.int32)
    ignore3 = jax.random.bernoulli(km3, 0.1, (N, H3, W))
    target3 = jnp.where(ignore3, jnp.int32(255), target3)
    ref3 = _reference_focal_phi_loss(pred3, target3)
    loss3 = jax.block_until_ready(focal_phi_loss(pred3, target3, tile_p=128))
    assert jnp.allclose(loss3, ref3, rtol=1e-4, atol=1e-5), (loss3, ref3)

    # 4) bf16 ingest path (kernel casts to f32 after the load).
    loss4 = jax.block_until_ready(
        focal_phi_loss(pred.astype(jnp.bfloat16), target))
    ref4 = _reference_focal_phi_loss(pred.astype(jnp.bfloat16), target)
    assert jnp.allclose(loss4, ref4, rtol=1e-3, atol=1e-4), (loss4, ref4)

    print("KERNEL_OK")
</pallas_src>

<mosaic_0001>
module attributes {stable_mosaic.version = 11 : i64} {
  func.func @_mcc_stats_kernel(%arg0: i32, %arg1: i32, %arg2: i32, %arg3: memref<1x4x256xf32, #tpu.memory_space<vmem>>, %arg4: memref<1x1x256xi32, #tpu.memory_space<vmem>>, %arg5: memref<1x4x4x1xf32, #tpu.memory_space<vmem>>) attributes {dimension_semantics = [#tpu.dimension_semantics<parallel>, #tpu.dimension_semantics<parallel>, #tpu.dimension_semantics<arbitrary>], iteration_bounds = array<i64: 2, 1, 1>, scalar_prefetch = 0 : i64, scratch_operands = 0 : i64, tpu.core_type = #tpu.core_type<tc>, window_params = [{transform_indices = @transform_0, window_bounds = array<i64: 1, 4, 256>}, {transform_indices = @transform_1, window_bounds = array<i64: 1, 1, 256>}, {transform_indices = @transform_2, window_bounds = array<i64: 1, 4, 4, 1>}]} {
    %c0_i32 = arith.constant 0 : i32
    %0 = arith.cmpi eq, %arg2, %c0_i32 : i32
    %1 = arith.extui %0 : i1 to i32
    %c0_i32_0 = arith.constant 0 : i32
    %2 = arith.cmpi ne, %1, %c0_i32_0 : i32
    scf.if %2 {
      %cst_43 = arith.constant 0.000000e+00 : f32
      %70 = vector.broadcast %cst_43 : f32 to vector<1x4x4x1xf32>
      %c0_44 = arith.constant 0 : index
      %c0_45 = arith.constant 0 : index
      %c0_46 = arith.constant 0 : index
      %c0_47 = arith.constant 0 : index
      %71 = vector.load %arg5[%c0_44, %c0_45, %c0_46, %c0_47] : memref<1x4x4x1xf32, #tpu.memory_space<vmem>>, vector<1x4x4x1xf32>
      tpu.vector_store %arg5[%c0_44, %c0_45, %c0_46, %c0_47], %70 {strides = array<i32>} : memref<1x4x4x1xf32, #tpu.memory_space<vmem>>, vector<1x4x4x1xf32>,
    } else {
    }
    %c0 = arith.constant 0 : index
    %c0_1 = arith.constant 0 : index
    %c0_2 = arith.constant 0 : index
    %3 = vector.load %arg3[%c0, %c0_1, %c0_2] : memref<1x4x256xf32, #tpu.memory_space<vmem>>, vector<1x4x256xf32>
    %4 = vector.shape_cast %3 : vector<1x4x256xf32> to vector<4x256xf32>
    %c0_3 = arith.constant 0 : index
    %c0_4 = arith.constant 0 : index
    %c0_5 = arith.constant 0 : index
    %5 = vector.load %arg4[%c0_3, %c0_4, %c0_5] : memref<1x1x256xi32, #tpu.memory_space<vmem>>, vector<1x1x256xi32>
    %6 = vector.shape_cast %5 : vector<1x1x256xi32> to vector<1x256xi32>
    %cst = arith.constant dense<0xFF800000> : vector<256xf32>
    %7 = vector.multi_reduction <maximumf>, %4, %cst [0] : vector<4x256xf32> to vector<256xf32>
    %8 = vector.shape_cast %7 : vector<256xf32> to vector<1x256xf32>
    %9 = vector.broadcast %8 : vector<1x256xf32> to vector<4x256xf32>
    %10 = arith.subf %4, %9 : vector<4x256xf32>
    %11 = math.exp %10 : vector<4x256xf32>
    %cst_6 = arith.constant dense<0.000000e+00> : vector<256xf32>
    %12 = vector.multi_reduction <add>, %11, %cst_6 [0] : vector<4x256xf32> to vector<256xf32>
    %13 = vector.shape_cast %12 : vector<256xf32> to vector<1x256xf32>
    %14 = tpu.reciprocal %13 {approx = true} : vector<1x256xf32> -> vector<1x256xf32>
    %15 = arith.mulf %13, %14 : vector<1x256xf32>
    %cst_7 = arith.constant 2.000000e+00 : f32
    %16 = vector.broadcast %cst_7 : f32 to vector<1x256xf32>
    %17 = arith.subf %16, %15 : vector<1x256xf32>
    %18 = arith.mulf %14, %17 : vector<1x256xf32>
    %c255_i32 = arith.constant 255 : i32
    %19 = vector.broadcast %c255_i32 : i32 to vector<1x256xi32>
    %20 = arith.cmpi ne, %6, %19 : vector<1x256xi32>
    %21 = arith.extui %20 : vector<1x256xi1> to vector<1x256xi32>
    %22 = arith.sitofp %21 : vector<1x256xi32> to vector<1x256xf32>
    %23 = arith.mulf %18, %22 : vector<1x256xf32>
    %24 = vector.broadcast %23 : vector<1x256xf32> to vector<4x256xf32>
    %25 = arith.mulf %11, %24 : vector<4x256xf32>
    %c0_i32_8 = arith.constant 0 : i32
    %c3_i32 = arith.constant 3 : i32
    %26 = vector.broadcast %c0_i32_8 : i32 to vector<1x256xi32>
    %27 = arith.maxsi %26, %6 : vector<1x256xi32>
    %28 = vector.broadcast %c3_i32 : i32 to vector<1x256xi32>
    %29 = arith.minsi %28, %27 : vector<1x256xi32>
    %c4_i32 = arith.constant 4 : i32
    %30 = vector.broadcast %c4_i32 : i32 to vector<1x256xi32>
    %31 = arith.select %20, %29, %30 : vector<1x256xi1>, vector<1x256xi32>
    %32 = tpu.iota {dimensions = array<i32: 0>} : vector<4x1xi32>
    %33 = vector.broadcast %32 : vector<4x1xi32> to vector<4x256xi32>
    %34 = vector.broadcast %31 : vector<1x256xi32> to vector<4x256xi32>
    %35 = arith.cmpi eq, %33, %34 : vector<4x256xi32>
    %36 = arith.extui %35 : vector<4x256xi1> to vector<4x256xi32>
    %37 = arith.sitofp %36 : vector<4x256xi32> to vector<4x256xf32>
    %cst_9 = arith.constant 1.000000e+00 : f32
    %38 = vector.broadcast %cst_9 : f32 to vector<256x1xf32>
    %39 = arith.mulf %25, %37 : vector<4x256xf32>
    %cst_10 = arith.constant dense<0.000000e+00> : vector<4x1xf32>
    %40 = tpu.matmul %39, %38, %cst_10 {dimension_numbers = #tpu.dot_dimension_numbers<[1], [0], [0], [1], [0, 0, 1, 1], [], []>} : vector<4x256xf32>, vector<256x1xf32>, vector<4x1xf32> -> vector<4x1xf32>
    %cst_11 = arith.constant dense<0.000000e+00> : vector<4x1xf32>
    %41 = tpu.matmul %25, %38, %cst_11 {dimension_numbers = #tpu.dot_dimension_numbers<[1], [0], [0], [1], [0, 0, 1, 1], [], []>} : vector<4x256xf32>, vector<256x1xf32>, vector<4x1xf32> -> vector<4x1xf32>
    %cst_12 = arith.constant dense<0.000000e+00> : vector<4x1xf32>
    %42 = tpu.matmul %37, %38, %cst_12 {dimension_numbers = #tpu.dot_dimension_numbers<[1], [0], [0], [1], [0, 0, 1, 1], [], []>} : vector<4x256xf32>, vector<256x1xf32>, vector<4x1xf32> -> vector<4x1xf32>
    %cst_13 = arith.constant dense<0.000000e+00> : vector<1xf32>
    %43 = vector.multi_reduction <add>, %22, %cst_13 [1] : vector<1x256xf32> to vector<1xf32>
    %44 = vector.shape_cast %43 : vector<1xf32> to vector<1x1xf32>
    %c0_14 = arith.constant 0 : index
    %c0_15 = arith.constant 0 : index
    %c0_16 = arith.constant 0 : index
    %c0_17 = arith.constant 0 : index
    %45 = vector.load %arg5[%c0_14, %c0_15, %c0_16, %c0_17] : memref<1x4x4x1xf32, #tpu.memory_space<vmem>>, vector<1x1x4x1xf32>
    %46 = vector.shape_cast %45 : vector<1x1x4x1xf32> to vector<4x1xf32>
    %47 = arith.addf %46, %40 : vector<4x1xf32>
    %c0_18 = arith.constant 0 : index
    %c0_19 = arith.constant 0 : index
    %c0_20 = arith.constant 0 : index
    %c0_21 = arith.constant 0 : index
    %48 = vector.load %arg5[%c0_18, %c0_19, %c0_20, %c0_21] : memref<1x4x4x1xf32, #tpu.memory_space<vmem>>, vector<1x1x4x1xf32>
    %49 = vector.shape_cast %48 : vector<1x1x4x1xf32> to vector<4x1xf32>
    %50 = vector.shape_cast %47 : vector<4x1xf32> to vector<1x1x4x1xf32>
    tpu.vector_store %arg5[%c0_18, %c0_19, %c0_20, %c0_21], %50 {strides = array<i32>} : memref<1x4x4x1xf32, #tpu.memory_space<vmem>>, vector<1x1x4x1xf32>,
    %c0_22 = arith.constant 0 : index
    %c1 = arith.constant 1 : index
    %c0_23 = arith.constant 0 : index
    %c0_24 = arith.constant 0 : index
    %51 = vector.load %arg5[%c0_22, %c1, %c0_23, %c0_24] : memref<1x4x4x1xf32, #tpu.memory_space<vmem>>, vector<1x1x4x1xf32>
    %52 = vector.shape_cast %51 : vector<1x1x4x1xf32> to vector<4x1xf32>
    %53 = arith.addf %52, %41 : vector<4x1xf32>
    %c0_25 = arith.constant 0 : index
    %c1_26 = arith.constant 1 : index
    %c0_27 = arith.constant 0 : index
    %c0_28 = arith.constant 0 : index
    %54 = vector.load %arg5[%c0_25, %c1_26, %c0_27, %c0_28] : memref<1x4x4x1xf32, #tpu.memory_space<vmem>>, vector<1x1x4x1xf32>
    %55 = vector.shape_cast %54 : vector<1x1x4x1xf32> to vector<4x1xf32>
    %56 = vector.shape_cast %53 : vector<4x1xf32> to vector<1x1x4x1xf32>
    tpu.vector_store %arg5[%c0_25, %c1_26, %c0_27, %c0_28], %56 {strides = array<i32>} : memref<1x4x4x1xf32, #tpu.memory_space<vmem>>, vector<1x1x4x1xf32>,
    %c0_29 = arith.constant 0 : index
    %c2 = arith.constant 2 : index
    %c0_30 = arith.constant 0 : index
    %c0_31 = arith.constant 0 : index
    %57 = vector.load %arg5[%c0_29, %c2, %c0_30, %c0_31] : memref<1x4x4x1xf32, #tpu.memory_space<vmem>>, vector<1x1x4x1xf32>
    %58 = vector.shape_cast %57 : vector<1x1x4x1xf32> to vector<4x1xf32>
    %59 = arith.addf %58, %42 : vector<4x1xf32>
    %c0_32 = arith.constant 0 : index
    %c2_33 = arith.constant 2 : index
    %c0_34 = arith.constant 0 : index
    %c0_35 = arith.constant 0 : index
    %60 = vector.load %arg5[%c0_32, %c2_33, %c0_34, %c0_35] : memref<1x4x4x1xf32, #tpu.memory_space<vmem>>, vector<1x1x4x1xf32>
    %61 = vector.shape_cast %60 : vector<1x1x4x1xf32> to vector<4x1xf32>
    %62 = vector.shape_cast %59 : vector<4x1xf32> to vector<1x1x4x1xf32>
    tpu.vector_store %arg5[%c0_32, %c2_33, %c0_34, %c0_35], %62 {strides = array<i32>} : memref<1x4x4x1xf32, #tpu.memory_space<vmem>>, vector<1x1x4x1xf32>,
    %c0_36 = arith.constant 0 : index
    %c3 = arith.constant 3 : index
    %c0_37 = arith.constant 0 : index
    %c0_38 = arith.constant 0 : index
    %63 = vector.load %arg5[%c0_36, %c3, %c0_37, %c0_38] : memref<1x4x4x1xf32, #tpu.memory_space<vmem>>, vector<1x1x4x1xf32>
    %64 = vector.shape_cast %63 : vector<1x1x4x1xf32> to vector<4x1xf32>
    %65 = vector.broadcast %44 : vector<1x1xf32> to vector<4x1xf32>
    %66 = arith.addf %64, %65 : vector<4x1xf32>
    %c0_39 = arith.constant 0 : index
    %c3_40 = arith.constant 3 : index
    %c0_41 = arith.constant 0 : index
    %c0_42 = arith.constant 0 : index
    %67 = vector.load %arg5[%c0_39, %c3_40, %c0_41, %c0_42] : memref<1x4x4x1xf32, #tpu.memory_space<vmem>>, vector<1x1x4x1xf32>
    %68 = vector.shape_cast %67 : vector<1x1x4x1xf32> to vector<4x1xf32>
    %69 = vector.shape_cast %66 : vector<4x1xf32> to vector<1x1x4x1xf32>
    tpu.vector_store %arg5[%c0_39, %c3_40, %c0_41, %c0_42], %69 {strides = array<i32>} : memref<1x4x4x1xf32, #tpu.memory_space<vmem>>, vector<1x1x4x1xf32>,
    return
  }
  func.func @transform_0(%arg0: i32, %arg1: i32, %arg2: i32) -> (i32, i32, i32) {
    %c1_i32 = arith.constant 1 : i32
    %0 = arith.muli %arg1, %c1_i32 : i32
    %1 = arith.addi %0, %arg2 : i32
    %c0_i32 = arith.constant 0 : i32
    %2 = arith.minsi %1, %c0_i32 : i32
    %c0_i32_0 = arith.constant 0 : i32
    %c0_i32_1 = arith.constant 0 : i32
    return %arg0, %c0_i32_0, %2 : i32, i32, i32
  }
  func.func @transform_1(%arg0: i32, %arg1: i32, %arg2: i32) -> (i32, i32, i32) {
    %c1_i32 = arith.constant 1 : i32
    %0 = arith.muli %arg1, %c1_i32 : i32
    %1 = arith.addi %0, %arg2 : i32
    %c0_i32 = arith.constant 0 : i32
    %c0_i32_0 = arith.constant 0 : i32
    return %arg0, %c0_i32, %1 : i32, i32, i32
  }
  func.func @transform_2(%arg0: i32, %arg1: i32, %arg2: i32) -> (i32, i32, i32, i32) {
    %c1_i32 = arith.constant 1 : i32
    %0 = arith.muli %arg0, %c1_i32 : i32
    %1 = arith.addi %0, %arg1 : i32
    %c0_i32 = arith.constant 0 : i32
    %c0_i32_0 = arith.constant 0 : i32
    %c0_i32_1 = arith.constant 0 : i32
    %c0_i32_2 = arith.constant 0 : i32
    return %1, %c0_i32, %c0_i32_0, %c0_i32_1 : i32, i32, i32, i32
  }
}

</mosaic_0001>

<llo_original>
// kernel: tpu_custom_call.1
$region0: #{tpu_custom_call.1}
  #allocation0 [shape = 'u32[]', space=smem, size = 0x4, offset = 0x4, fixed_abs, tag = 'smem constant byte address 0x4 - core index']
  #allocation1 [shape = 'u32[72,128]{1,0:T(1,128)}', space=vmem, size = 0x9000, scoped, tag = 'internal scratch']
  %s0 = inlined_call_operand.hbm [shape: f32[2,4,256], index: 0, kind: input, shape index: {}]
  %s1 = inlined_call_operand.hbm [shape: s32[2,1,256], index: 1, kind: input, shape index: {}]
  %s2 = inlined_call_operand.vmem [shape: f32[2,4,4,1], index: 2, kind: output, shape index: {}]
  %s3 = sld [smem:[#allocation0]]
  $region53: #{tpu_custom_call.1} parent=0
    _
  %s5 = ssub.s32 1, %s3
  %s6 = scalar_select 0, %s5, %s3
  $region1: #{tpu_custom_call.1} parent=0
    #allocation2 [shape = 'u8[8192]{0}', space=vmem, size = 0x2000, scoped, tag = 'input window, operand 0']
    #allocation3 [shape = 's32[2]{0}', space=sflag, size = 0x8, scoped, tag = 'scoped memory for tpu_custom_call.1']
    #allocation4 [shape = 'u8[2048]{0}', space=vmem, size = 0x800, scoped, tag = 'input window, operand 1']
    #allocation5 [shape = 's32[2]{0}', space=sflag, size = 0x8, scoped, tag = 'scoped memory for tpu_custom_call.1']
    %7 = vsyncpa [#allocation3], 0
    %s8 = scalar_lea.sflag [#allocation3], 1
    %9 = vsyncpa %s8, 0
    %10 = vsyncpa [#allocation5], 0
    %s11 = scalar_lea.sflag [#allocation5], 1
    %12 = vsyncpa %s11, 0
    loop: start=0, step=1, limit=4
    $region2: #{tpu_custom_call.1} parent=1 // loop_pre_header
      _
    $region3: #{tpu_custom_call.1} parent=1 // loop_header
      %s14 = sphi 0, %s18
      %p15 = scmp.ge.s32.totalorder %s14, 4
      %s21 = sphi 0, %s40
      %s22 = sphi 0, %s36
      %s23 = sphi 0, %s32
      %s24 = sphi 0, %s21
      %s25 = sphi 0, %s22
      %s26 = sphi 0, %s23
      %s27 = sphi 0, %s24
      %s28 = sphi 0, %s25
      %s29 = sphi 0, %s26
      %s51 = sphi 0, %s53
      %s54 = sphi 0, %s51
      %s55 = sphi 0, %s54
      %s71 = sphi 0, %s55
      %s81 = sphi 0, %s83
      %s84 = sphi 0, %s81
      %s85 = sphi 0, %s84
      %s101 = sphi 0, %s85
      %s109 = sphi 0, %s111
      %s112 = sphi 0, %s109
      %s113 = sphi 0, %s112
      %s129 = sphi 0, %s113
    $region4: #{tpu_custom_call.1} parent=1 // loop_header_branch
      %17 = sbr.rel (%p15) target = $region8
    $region5: #{tpu_custom_call.1} parent=1 // loop_body
      %s19 = ssub.s32 %s14, 1
      %s20 = ssub.s32 %s14, 2
      %s30 = sadd.s32 1, %s23
      %p31 = scmp.ge.s32.totalorder %s30, 1
      %s32 = scalar_select %p31, 0, %s30
      %s33 = sadd.s32 1, %s22
      %s34 = scalar_select %p31, %s33, %s22
      %p35 = scmp.ge.s32.totalorder %s34, 1
      %s36 = scalar_select %p35, 0, %s34
      %s37 = sadd.s32 1, %s21
      %s38 = scalar_select %p35, %s37, %s21
      %p39 = scmp.ge.s32.totalorder %s38, 2
      %s40 = scalar_select %p39, 0, %s38
      %s41 = sadd.s32 %s22, %s23
      %p42 = scmp.lt.s32.totalorder %s41, 0
      %s43 = scalar_select %p42, %s41, 0
      %s44 = sadd.s32 %s36, %s32
      %p45 = scmp.lt.s32.totalorder %s44, 0
      %s46 = scalar_select %p45, %s44, 0
      %s47 = ssub.s32 %s21, %s40
      %s48 = ssub.s32 %s43, %s46
      %s49 = sor.u32 %s47, %s48
      %p50 = scmp.eq.s32.totalorder %s49, 0
      %s52 = sadd.s32 %s51, 1
      %s53 = scalar_select %p50, %s51, %s52
      %p56 = pneg %p50
      %p57 = scmp.eq.s32.totalorder %s14, 1
      %p58 = por %p56, %p57
      %p59 = scmp.ne.s32.totalorder %s51, %s54
      %p60 = scmp.eq.s32.totalorder %s14, 0
      %p61 = por %p59, %p60
      %p62 = scmp.ne.s32.totalorder %s51, %s54
      %p63 = scmp.eq.s32.totalorder %s19, 1
      %p64 = por %p62, %p63
      %p65 = scmp.ne.s32.totalorder %s54, %s55
      %p66 = scmp.eq.s32.totalorder %s19, 0
      %p67 = por %p65, %p66
      %p68 = scmp.ne.s32.totalorder %s54, %s55
      %p69 = scmp.eq.s32.totalorder %s20, 1
      %p70 = por %p68, %p69
      %p72 = scmp.ne.s32.totalorder %s55, %s71
      %p73 = scmp.eq.s32.totalorder %s20, 0
      %p74 = por %p72, %p73
      %s75 = sadd.s32 %s22, %s23
      %s76 = sadd.s32 %s36, %s32
      %s77 = ssub.s32 %s21, %s40
      %s78 = ssub.s32 %s75, %s76
      %s79 = sor.u32 %s77, %s78
      %p80 = scmp.eq.s32.totalorder %s79, 0
      %s82 = sadd.s32 %s81, 1
      %s83 = scalar_select %p80, %s81, %s82
      %p86 = pneg %p80
      %p87 = scmp.eq.s32.totalorder %s14, 1
      %p88 = por %p86, %p87
      %p89 = scmp.ne.s32.totalorder %s81, %s84
      %p90 = scmp.eq.s32.totalorder %s14, 0
      %p91 = por %p89, %p90
      %p92 = scmp.ne.s32.totalorder %s81, %s84
      %p93 = scmp.eq.s32.totalorder %s19, 1
      %p94 = por %p92, %p93
      %p95 = scmp.ne.s32.totalorder %s84, %s85
      %p96 = scmp.eq.s32.totalorder %s19, 0
      %p97 = por %p95, %p96
      %p98 = scmp.ne.s32.totalorder %s84, %s85
      %p99 = scmp.eq.s32.totalorder %s20, 1
      %p100 = por %p98, %p99
      %p102 = scmp.ne.s32.totalorder %s85, %s101
      %p103 = scmp.eq.s32.totalorder %s20, 0
      %p104 = por %p102, %p103
      %s105 = sadd.s32 %s21, %s22
      %s106 = sadd.s32 %s40, %s36
      %s107 = ssub.s32 %s105, %s106
      %p108 = scmp.eq.s32.totalorder %s107, 0
      %s110 = sadd.s32 %s109, 1
      %s111 = scalar_select %p108, %s109, %s110
      %p114 = pneg %p108
      %p115 = scmp.eq.s32.totalorder %s14, 1
      %p116 = por %p114, %p115
      %p117 = scmp.ne.s32.totalorder %s109, %s112
      %p118 = scmp.eq.s32.totalorder %s14, 0
      %p119 = por %p117, %p118
      %p120 = scmp.ne.s32.totalorder %s109, %s112
      %p121 = scmp.eq.s32.totalorder %s19, 1
      %p122 = por %p120, %p121
      %p123 = scmp.ne.s32.totalorder %s112, %s113
      %p124 = scmp.eq.s32.totalorder %s19, 0
      %p125 = por %p123, %p124
      %p126 = scmp.ne.s32.totalorder %s112, %s113
      %p127 = scmp.eq.s32.totalorder %s20, 1
      %p128 = por %p126, %p127
      %p130 = scmp.ne.s32.totalorder %s113, %s129
      %p131 = scmp.eq.s32.totalorder %s20, 0
      %p132 = por %p130, %p131
      %p133 = scmp.le.s32.totalorder 1, %s14
      %p134 = scmp.lt.s32.totalorder %s14, 3
      %p135 = pnand %p133, %p134
      %p136 = pneg %p135
      // Predicated region
      $region9: #{tpu_custom_call.1} parent=5 // pred_check
        _
      $region10: #{tpu_custom_call.1} parent=5 // pred_check_branch
        %138 = sbr.rel (%p135) target = $region12
      $region11: #{tpu_custom_call.1} parent=5 // pred_region
        %s139 = ssub.s32 %s14, 1
      $region12: #{tpu_custom_call.1} parent=5 // pred_fallthru
        _
      %p140 = scmp.lt.s32.totalorder %s14, 2
      // Predicated region
      $region13: #{tpu_custom_call.1} parent=5 // pred_check
        %p141 = pneg %p140
      $region14: #{tpu_custom_call.1} parent=5 // pred_check_branch
        %143 = sbr.rel (%p141) target = $region16
      $region15: #{tpu_custom_call.1} parent=5 // pred_region
        // Predicated region
        $region17: #{tpu_custom_call.1} parent=15 // pred_check
          %p144 = pneg %p61
        $region18: #{tpu_custom_call.1} parent=15 // pred_check_branch
          %146 = sbr.rel (%p144) target = $region20
        $region19: #{tpu_custom_call.1} parent=15 // pred_region
          %s147 = sand.u32 %s51, 1
          %s148 = scalar_lea.sflag [#allocation3], %s147
          %s149 = sand.u32 %s51, 1
          %s150 = smul.addr %s149, 8
          %s151 = scalar_lea.vmem [#allocation2], %s150
          %s152 = sadd.s32 %s22, %s23
          %p153 = scmp.lt.s32.totalorder %s152, 0
          %s154 = scalar_select %p153, %s152, 0
          %s155 = smul.u32 2, %s154
          %157 = vsyncadd %s148, 0
          %s158 = smul.addr %s21, 2
          %s159 = sadd.s32 %s155, %s158
          %s160 = smul.addr %s159, 4
          %s161 = scalar_lea.hbm %s0, %s160
          %s163 = sshll.u32 %s161, 4
          %s164 = int_to_ptr.hbm [resolvable:$true] %s163
          %s165 = sshll.u32 %s151, 4
          %s166 = int_to_ptr.vmem [resolvable:$true] %s165
          %168 = dma.hbm_to_vmem [thread:$0]  %s164, 128, %s166, %s148
        $region20: #{tpu_custom_call.1} parent=15 // pred_fallthru
          _
        // Predicated region
        $region21: #{tpu_custom_call.1} parent=15 // pred_check
          %p169 = pneg %p91
        $region22: #{tpu_custom_call.1} parent=15 // pred_check_branch
          %171 = sbr.rel (%p169) target = $region24
        $region23: #{tpu_custom_call.1} parent=15 // pred_region
          %s172 = sand.u32 %s81, 1
          %s173 = scalar_lea.sflag [#allocation5], %s172
          %s174 = sand.u32 %s81, 1
          %s175 = smul.addr %s174, 2
          %s176 = scalar_lea.vmem [#allocation4], %s175
          %s177 = sadd.s32 %s22, %s23
          %s178 = smul.u32 2, %s177
          %180 = vsyncadd %s173, 0
          %s181 = smul.addr %s21, 2
          %s182 = sadd.s32 %s178, %s181
          %s183 = scalar_lea.hbm %s1, %s182
          %s185 = sshll.u32 %s183, 4
          %s186 = int_to_ptr.hbm [resolvable:$true] %s185
          %s187 = sshll.u32 %s176, 4
          %s188 = int_to_ptr.vmem [resolvable:$true] %s187
          %190 = dma.hbm_to_vmem [thread:$0]  %s186, 32, %s188, %s173
        $region24: #{tpu_custom_call.1} parent=15 // pred_fallthru
          _
      $region16: #{tpu_custom_call.1} parent=5 // pred_fallthru
        _
      %p191 = scmp.le.s32.totalorder 1, %s14
      %p192 = scmp.lt.s32.totalorder %s14, 3
      %p193 = pnand %p191, %p192
      %p194 = pneg %p193
      // Predicated region
      $region25: #{tpu_custom_call.1} parent=5 // pred_check
        _
      $region26: #{tpu_custom_call.1} parent=5 // pred_check_branch
        %196 = sbr.rel (%p193) target = $region28
      $region27: #{tpu_custom_call.1} parent=5 // pred_region
        %s197 = ssub.s32 %s14, 1
        %s198 = sand.u32 %s54, 1
        %s199 = scalar_lea.sflag [#allocation3], %s198
        %s200 = sand.u32 %s54, 1
        %s201 = smul.addr %s200, 8
        %s202 = scalar_lea.vmem [#allocation2], %s201
        // Predicated region
        $region29: #{tpu_custom_call.1} parent=27 // pred_check
          %p203 = pneg %p67
        $region30: #{tpu_custom_call.1} parent=27 // pred_check_branch
          %205 = sbr.rel (%p203) target = $region32
        $region31: #{tpu_custom_call.1} parent=27 // pred_region
          %207 = dma.done %s199, 128
        $region32: #{tpu_custom_call.1} parent=27 // pred_fallthru
          _
        %s208 = sand.u32 %s84, 1
        %s209 = scalar_lea.sflag [#allocation5], %s208
        %s210 = sand.u32 %s84, 1
        %s211 = smul.addr %s210, 2
        %s212 = scalar_lea.vmem [#allocation4], %s211
        // Predicated region
        $region33: #{tpu_custom_call.1} parent=27 // pred_check
          %p213 = pneg %p97
        $region34: #{tpu_custom_call.1} parent=27 // pred_check_branch
          %215 = sbr.rel (%p213) target = $region36
        $region35: #{tpu_custom_call.1} parent=27 // pred_region
          %217 = dma.done %s209, 32
        $region36: #{tpu_custom_call.1} parent=27 // pred_fallthru
          _
        %s218 = sand.u32 %s54, 1
        %s219 = scalar_lea.sflag [#allocation3], %s218
        %s220 = sand.u32 %s54, 1
        %s221 = smul.addr %s220, 8
        %s222 = scalar_lea.vmem [#allocation2], %s221
        %p223 = pneg %p67
        %p224 = pneg %p64
        %s225 = sand.u32 %s84, 1
        %s226 = scalar_lea.sflag [#allocation5], %s225
        %s227 = sand.u32 %s84, 1
        %s228 = smul.addr %s227, 2
        %s229 = scalar_lea.vmem [#allocation4], %s228
        %p230 = pneg %p97
        %p231 = pneg %p94
        %p232 = pneg %p125
        %p233 = pneg %p122
        %s234 = sadd.s32 %s24, %s25
        %p235 = scmp.lt.s32.totalorder %s234, 1
        %s236 = scalar_select %p235, %s234, 1
        %s237 = smul.addr %s236, 4
        %s238 = smul.addr %s237, 4
        %s239 = scalar_lea.vmem %s2, %s238
        %s240 = sadd.s32 %s25, %s26
        %p241 = scmp.lt.s32.totalorder %s240, 0
        %s242 = scalar_select %p241, %s240, 0
        %s243 = smul.u32 2, %s242
        %s244 = sadd.s32 %s25, %s26
        %s245 = smul.u32 2, %s244
        %s246 = sadd.s32 %s24, %s25
        %p247 = scmp.lt.s32.totalorder %s246, 1
        %s248 = scalar_select %p247, %s246, 1
        %s249 = smul.addr %s248, 4
        %s250 = smul.addr %s249, 4
        %s251 = scalar_lea.vmem %s2, %s250
        %s252 = sadd.s32 %s24, %s25
        %p253 = scmp.eq.s32.totalorder %s26, 0
        // Predicated region
        $region37: #{tpu_custom_call.1} parent=27 // pred_check
          %p254 = pneg %p253
        $region38: #{tpu_custom_call.1} parent=27 // pred_check_branch
          %256 = sbr.rel (%p254) target = $region40
        $region39: #{tpu_custom_call.1} parent=27 // pred_region
          %vm257 = vcmask 3072
          %258 = vst.msk [vmem:[%s251] sm:$0xf] %vm257, 0.0
          %259 = vst.msk [vmem:[%s251 + $0x4] sm:$0xf] %vm257, 0.0
          %260 = vst.msk [vmem:[%s251 + $0x8] sm:$0xf] %vm257, 0.0
          %261 = vst.msk [vmem:[%s251 + $0xc] sm:$0xf] %vm257, 0.0
        $region40: #{tpu_custom_call.1} parent=27 // pred_fallthru
          _
        %v262 = vld [vmem:[%s202] sm:$0xff]
        %v263 = vld [vmem:[%s212] sm:$0x3]
        %265 = vst [vmem:[#allocation1] ss:$2 sm:$0xff] %v262
        %v266 = vld.sshfl [vmem:[#allocation1] sm:$0xff pattern:$0x75316420]
        %v267 = vld.sshfl [vmem:[#allocation1 + $0x8] sm:$0xff pattern:$0x75316420]
        %vm270 = vcmask 1043456
        %v271 = vsel %vm270, %v266, -inf
        %v272 = vrot.slane %v271, 4
        %v273 = vmax.f32 %v271, %v272
        %v274 = vrot.slane %v273, 2
        %v275 = vmax.f32 %v273, %v274
        %v276 = vrot.slane %v275, 1
        %v277 = vmax.f32 %v275, %v276
        %v278 = vsel %vm270, %v267, -inf
        %v279 = vrot.slane %v278, 4
        %v280 = vmax.f32 %v278, %v279
        %v281 = vrot.slane %v280, 2
        %v282 = vmax.f32 %v280, %v281
        %v283 = vrot.slane %v282, 1
        %v284 = vmax.f32 %v282, %v283
        %v287 = vrot.slane %v284, 4
        %v288 = vsel %vm270, %v277, %v287
        %v290 = vsub.f32 %v262, %v288
        %v291 = vmul.f32 %v290, 1.442695
        %v292 = vpow.pop %v291
        %294 = vst [vmem:[#allocation1] ss:$2 sm:$0xff] %v292
        %v295 = vld.sshfl [vmem:[#allocation1] sm:$0xff pattern:$0x75316420]
        %v296 = vld.sshfl [vmem:[#allocation1 + $0x8] sm:$0xff pattern:$0x75316420]
        %v299 = vsel %vm270, %v295, 0.0
        %v300 = vrot.slane %v299, 4
        %v301 = vadd.f32 %v299, %v300
        %v302 = vrot.slane %v301, 2
        %v303 = vadd.f32 %v301, %v302
        %v304 = vrot.slane %v303, 1
        %v305 = vadd.f32 %v303, %v304
        %v306 = vsel %vm270, %v296, 0.0
        %v307 = vrot.slane %v306, 4
        %v308 = vadd.f32 %v306, %v307
        %v309 = vrot.slane %v308, 2
        %v310 = vadd.f32 %v308, %v309
        %v311 = vrot.slane %v310, 1
        %v312 = vadd.f32 %v310, %v311
        %v313 = vrcp.pop %v305
        %v314 = vrcp.pop %v312
        %v315 = vmul.f32 %v305, %v313
        %v316 = vmul.f32 %v312, %v314
        %v317 = vsub.f32 2.0, %v315
        %v318 = vsub.f32 2.0, %v316
        %v319 = vmul.f32 %v313, %v317
        %v320 = vmul.f32 %v314, %v318
        %vm321 = vcmp.ne.s32.totalorder %v263, 255
        %v322 = vsel %vm321, 1, 0
        %v323 = vcvt.s32.f32 %v322
        %v325 = vperm.slane %v323, 0
        %v326 = vperm.slane %v323, 1
        %v329 = vmul.f32 %v319, %v325
        %v330 = vmul.f32 %v320, %v326
        %v331 = vperm.slane %v329, 0
        %v332 = vperm.slane %v330, 0
        %v335 = vrot.slane %v332, 4
        %v336 = vsel %vm270, %v331, %v335
        %v338 = vmul.f32 %v292, %v336
        %vm339 = vcmp.gt.s32.totalorder %v263, 0
        %v340 = vsel %vm339, %v263, 0
        %vm341 = vcmp.lt.s32.totalorder %v340, 3
        %v342 = vsel %vm341, %v340, 3
        %v343 = vsel %vm321, %v342, 4
        %v344 = vlaneseq
        %v345 = vshrl.u32 %v344, 7
        %v346 = vperm.slane %v343, 0
        %v347 = vperm.slane %v343, 1
        %vm348 = vcmp.eq.s32.totalorder %v345, %v346
        %vm349 = vcmp.eq.s32.totalorder %v345, %v347
        %v350 = vsel %vm348, 1, 0
        %v351 = vsel %vm349, 1, 0
        %v352 = vcvt.s32.f32 %v350
        %v353 = vcvt.s32.f32 %v351
        %v356 = vrot.slane %v353, 4
        %v357 = vsel %vm270, %v352, %v356
        %v359 = vmul.f32 %v338, %v357
        %361 = vst [vmem:[#allocation1] ss:$2 sm:$0xff] %v359
        %v362 = vld.sshfl [vmem:[#allocation1] sm:$0xff pattern:$0x75316420]
        %v363 = vld.sshfl [vmem:[#allocation1 + $0x8] sm:$0xff pattern:$0x75316420]
        %366 = vmatpush.msra.mxu0 1.0
        %367 = vmatpush.msra.mxu0 1.0
        %368 = vmatpush.msra.mxu0 1.0
        %369 = vmatpush.msra.mxu0 1.0
        %370 = vmatpush.msra.mxu0 1.0
        %371 = vmatpush.msra.mxu0 1.0
        %372 = vmatpush.msra.mxu0 1.0
        %373 = vmatpush.msra.mxu0 1.0
        %374 = vmatpush.msra.mxu0 1.0
        %375 = vmatpush.msra.mxu0 1.0
        %376 = vmatpush.msra.mxu0 1.0
        %377 = vmatpush.msra.mxu0 1.0
        %378 = vmatpush.msra.mxu0 1.0
        %379 = vmatpush.msra.mxu0 1.0
        %380 = vmatpush.msra.mxu0 1.0
        %381 = vmatpush.msra.mxu0 1.0
        %382 = vmatmul.f32.gmra.mxu0 %v362
        %v383 = vpop.f32.mrf.mxu0
        %v384 = vadd.f32 0.0, %v383
        %385 = vdwg.mxu0
        %386 = vmatpush.msra.mxu0 1.0
        %387 = vmatpush.msra.mxu0 1.0
        %388 = vmatpush.msra.mxu0 1.0
        %389 = vmatpush.msra.mxu0 1.0
        %390 = vmatpush.msra.mxu0 1.0
        %391 = vmatpush.msra.mxu0 1.0
        %392 = vmatpush.msra.mxu0 1.0
        %393 = vmatpush.msra.mxu0 1.0
        %394 = vmatpush.msra.mxu0 1.0
        %395 = vmatpush.msra.mxu0 1.0
        %396 = vmatpush.msra.mxu0 1.0
        %397 = vmatpush.msra.mxu0 1.0
        %398 = vmatpush.msra.mxu0 1.0
        %399 = vmatpush.msra.mxu0 1.0
        %400 = vmatpush.msra.mxu0 1.0
        %401 = vmatpush.msra.mxu0 1.0
        %402 = vmatmul.f32.gmra.mxu0 %v363
        %v403 = vpop.f32.mrf.mxu0
        %v404 = vadd.f32 %v384, %v403
        %405 = vdwg.mxu0
        %407 = vst [vmem:[#allocation1] ss:$2 sm:$0xff] %v338
        %v408 = vld.sshfl [vmem:[#allocation1] sm:$0xff pattern:$0x75316420]
        %v409 = vld.sshfl [vmem:[#allocation1 + $0x8] sm:$0xff pattern:$0x75316420]
        %412 = vmatpush.msra.mxu0 1.0
        %413 = vmatpush.msra.mxu0 1.0
        %414 = vmatpush.msra.mxu0 1.0
        %415 = vmatpush.msra.mxu0 1.0
        %416 = vmatpush.msra.mxu0 1.0
        %417 = vmatpush.msra.mxu0 1.0
        %418 = vmatpush.msra.mxu0 1.0
        %419 = vmatpush.msra.mxu0 1.0
        %420 = vmatpush.msra.mxu0 1.0
        %421 = vmatpush.msra.mxu0 1.0
        %422 = vmatpush.msra.mxu0 1.0
        %423 = vmatpush.msra.mxu0 1.0
        %424 = vmatpush.msra.mxu0 1.0
        %425 = vmatpush.msra.mxu0 1.0
        %426 = vmatpush.msra.mxu0 1.0
        %427 = vmatpush.msra.mxu0 1.0
        %428 = vmatmul.f32.gmra.mxu0 %v408
        %v429 = vpop.f32.mrf.mxu0
        %v430 = vadd.f32 0.0, %v429
        %431 = vdwg.mxu0
        %432 = vmatpush.msra.mxu0 1.0
        %433 = vmatpush.msra.mxu0 1.0
        %434 = vmatpush.msra.mxu0 1.0
        %435 = vmatpush.msra.mxu0 1.0
        %436 = vmatpush.msra.mxu0 1.0
        %437 = vmatpush.msra.mxu0 1.0
        %438 = vmatpush.msra.mxu0 1.0
        %439 = vmatpush.msra.mxu0 1.0
        %440 = vmatpush.msra.mxu0 1.0
        %441 = vmatpush.msra.mxu0 1.0
        %442 = vmatpush.msra.mxu0 1.0
        %443 = vmatpush.msra.mxu0 1.0
        %444 = vmatpush.msra.mxu0 1.0
        %445 = vmatpush.msra.mxu0 1.0
        %446 = vmatpush.msra.mxu0 1.0
        %447 = vmatpush.msra.mxu0 1.0
        %448 = vmatmul.f32.gmra.mxu0 %v409
        %v449 = vpop.f32.mrf.mxu0
        %v450 = vadd.f32 %v430, %v449
        %451 = vdwg.mxu0
        %452 = vmatpush.msra.mxu0 1.0
        %453 = vmatpush.msra.mxu0 1.0
        %454 = vmatpush.msra.mxu0 1.0
        %455 = vmatpush.msra.mxu0 1.0
        %456 = vmatpush.msra.mxu0 1.0
        %457 = vmatpush.msra.mxu0 1.0
        %458 = vmatpush.msra.mxu0 1.0
        %459 = vmatpush.msra.mxu0 1.0
        %460 = vmatpush.msra.mxu0 1.0
        %461 = vmatpush.msra.mxu0 1.0
        %462 = vmatpush.msra.mxu0 1.0
        %463 = vmatpush.msra.mxu0 1.0
        %464 = vmatpush.msra.mxu0 1.0
        %465 = vmatpush.msra.mxu0 1.0
        %466 = vmatpush.msra.mxu0 1.0
        %467 = vmatpush.msra.mxu0 1.0
        %468 = vmatmul.f32.gmra.mxu0 %v352
        %v469 = vpop.f32.mrf.mxu0
        %v470 = vadd.f32 0.0, %v469
        %471 = vdwg.mxu0
        %472 = vmatpush.msra.mxu0 1.0
        %473 = vmatpush.msra.mxu0 1.0
        %474 = vmatpush.msra.mxu0 1.0
        %475 = vmatpush.msra.mxu0 1.0
        %476 = vmatpush.msra.mxu0 1.0
        %477 = vmatpush.msra.mxu0 1.0
        %478 = vmatpush.msra.mxu0 1.0
        %479 = vmatpush.msra.mxu0 1.0
        %480 = vmatpush.msra.mxu0 1.0
        %481 = vmatpush.msra.mxu0 1.0
        %482 = vmatpush.msra.mxu0 1.0
        %483 = vmatpush.msra.mxu0 1.0
        %484 = vmatpush.msra.mxu0 1.0
        %485 = vmatpush.msra.mxu0 1.0
        %486 = vmatpush.msra.mxu0 1.0
        %487 = vmatpush.msra.mxu0 1.0
        %488 = vmatmul.f32.gmra.mxu0 %v353
        %v489 = vpop.f32.mrf.mxu0
        %v490 = vadd.f32 %v470, %v489
        %491 = vdwg.mxu0
        %vm492 = vcmask 1040384
        %v493 = vsel %vm492, %v325, 0.0
        %v494 = vsel %vm492, %v326, 0.0
        %v495 = vadd.f32 %v493, %v494
        %496 = vadd.xlane.f32.xlu0 %v495
        %v497 = vpop.xlane.xlu0 %496
        %v498 = vld [vmem:[%s251] sm:$0xf]
        %v499 = vadd.f32 %v498, %v404
        %vm500 = vcmask 3072
        %501 = vst.msk [vmem:[%s251] sm:$0xf] %vm500, %v499
        %s502 = scalar_lea.vmem %s251, 4
        %v503 = vld [vmem:[%s502] sm:$0xf]
        %v504 = vadd.f32 %v503, %v450
        %505 = vst.msk [vmem:[%s502] sm:$0xf] %vm500, %v504
        %s506 = scalar_lea.vmem %s251, 8
        %v507 = vld [vmem:[%s506] sm:$0xf]
        %v508 = vadd.f32 %v507, %v490
        %509 = vst.msk [vmem:[%s506] sm:$0xf] %vm500, %v508
        %s510 = scalar_lea.vmem %s251, 12
        %v511 = vld [vmem:[%s510] sm:$0xf]
        %v512 = vperm.slane %v497, 0
        %v513 = vadd.f32 %v511, %v512
        %514 = vst.msk [vmem:[%s510] sm:$0xf] %vm500, %v513
        %s515 = sadd.s32 %s24, %s25
        %p516 = scmp.lt.s32.totalorder %s515, 1
        %s517 = scalar_select %p516, %s515, 1
        %s518 = smul.addr %s517, 4
        %s519 = smul.addr %s518, 4
        %s520 = scalar_lea.vmem %s2, %s519
        // Predicated region
        $region41: #{tpu_custom_call.1} parent=27 // pred_check
          %p521 = pneg %p122
        $region42: #{tpu_custom_call.1} parent=27 // pred_check_branch
          %523 = sbr.rel (%p521) target = $region44
        $region43: #{tpu_custom_call.1} parent=27 // pred_region
          %s524 = sadd.s32 %s24, %s25
        $region44: #{tpu_custom_call.1} parent=27 // pred_fallthru
          _
      $region28: #{tpu_custom_call.1} parent=5 // pred_fallthru
        _
      %p525 = scmp.le.s32.totalorder 2, %s14
      // Predicated region
      $region45: #{tpu_custom_call.1} parent=5 // pred_check
        %p526 = pneg %p525
      $region46: #{tpu_custom_call.1} parent=5 // pred_check_branch
        %528 = sbr.rel (%p526) target = $region48
      $region47: #{tpu_custom_call.1} parent=5 // pred_region
        %s529 = ssub.s32 %s14, 2
        // Predicated region
        $region49: #{tpu_custom_call.1} parent=47 // pred_check
          %p530 = pneg %p128
        $region50: #{tpu_custom_call.1} parent=47 // pred_check_branch
          %532 = sbr.rel (%p530) target = $region52
        $region51: #{tpu_custom_call.1} parent=47 // pred_region
          %s533 = sadd.s32 %s27, %s28
          %p534 = scmp.lt.s32.totalorder %s533, 1
          %s535 = scalar_select %p534, %s533, 1
          %s536 = smul.addr %s535, 4
          %s537 = smul.addr %s536, 4
          %s538 = scalar_lea.vmem %s2, %s537
        $region52: #{tpu_custom_call.1} parent=47 // pred_fallthru
          _
      $region48: #{tpu_custom_call.1} parent=5 // pred_fallthru
        _
    $region6: #{tpu_custom_call.1} parent=1 // loop_footer
      %s18 = sadd.s32 1, %s14
    $region7: #{tpu_custom_call.1} parent=1 // loop_footer_branch
      %13 = sbr.rel target = $region3
    $region8: #{tpu_custom_call.1} parent=1 // loop_exit
      _
    %539 = vsyncpa [#allocation3], 1
    %s540 = scalar_lea.sflag [#allocation3], 1
    %541 = vsyncpa %s540, 1
    %542 = vsyncpa [#allocation5], 1
    %s543 = scalar_lea.sflag [#allocation5], 1
    %544 = vsyncpa %s543, 1

</llo_original>
